<compile_context>
chip_gen: v6e
topology: v6e:2x2x1
jax: 0.10.0
libtpu: 0.0.40
codegen_flags: <defaults>
</compile_context>

<pallas_src>
import math
from functools import partial

import jax
import jax.numpy as jnp
from jax.experimental import pallas as pl
from jax.experimental.pallas import tpu as pltpu

SUBLANE = 8
COLS = 512                            # lane-dense slab width (multiple of 128)
ACC_ROWS = 512                        # fixed-height f32 VMEM accumulator
MAX_TILE_ROWS = 2048                  # up to 4 MiB f32 input blocks
IN_BYTES_BUDGET = 20 * 1024 * 1024    # budget for input double buffers / call
VMEM_LIMIT_BYTES = 32 * 1024 * 1024   # explicit scoped-VMEM limit (v5e/v6e/v7x safe)


def _round_up(x, m):
    return -(-x // m) * m


def _round_down(x, m):
    return (x // m) * m


def _cdiv(a, b):
    return -(-a // b)


def _num_tensorcores():
    """Best-effort TensorCores per device (for the 'parallel' core axis); default 1."""
    try:
        info = pltpu.get_tpu_info()
        for name in ("num_cores", "num_tensorcores", "tensor_core_count",
                     "num_cores_per_chip", "core_count"):
            v = getattr(info, name, None)
            if v is not None:
                v = int(v)
                if 1 <= v <= 16:
                    return v
    except Exception:
        pass
    try:
        v = getattr(jax.devices()[0], "num_cores", None)
        if v is not None:
            v = int(v)
            if 1 <= v <= 16:
                return v
    except Exception:
        pass
    return 1


def _to_slab(x, fill):
    """Flatten to a lane-dense (rows, COLS) slab.

    Zero-copy (pure reshape) whenever x.size is a multiple of COLS; otherwise
    only the ragged tail (< COLS elements) is padded with the reduction
    identity `fill` (rare, and bounded to one row of padding).
    """
    flat = x.reshape(-1)
    rem = flat.size % COLS
    if rem:
        flat = jnp.concatenate(
            [flat, jnp.full((COLS - rem,), fill, dtype=flat.dtype)])
    return flat.reshape(-1, COLS)


def _chunks(cover, acc_rows):
    """Static (offset, n) chunks covering `cover` rows in <= acc_rows pieces."""
    out, off = [], 0
    while off < cover:
        n = min(acc_rows, cover - off)
        out.append((off, n))
        off += n
    return out


# ---------------------------------------------------------------------------
# Fused  sum_k sum(log(x_k))  over an arbitrary list of tensors (rate term).
# One grid over the union of all tensors' blocks; per-input pl.when gating.
# ---------------------------------------------------------------------------
def _make_multi_log_kernel(metas, blocks_per_core):
    # metas: list of (rows, tile_rows, nblocks, start, need_mask, chunks)
    K = len(metas)

    def kernel(*refs):
        x_refs = refs[:K]
        o_ref = refs[K]
        acc_ref = refs[K + 1]
        c = pl.program_id(0)
        i = pl.program_id(1)
        g = c * blocks_per_core + i          # global block index

        @pl.when(i == 0)
        def _():
            acc_ref[...] = jnp.zeros_like(acc_ref)

        for k, (rows, tile_rows, nblocks, start, need_mask, chunks) in enumerate(metas):
            @pl.when((g >= start) & (g < start + nblocks))
            def _(k=k, rows=rows, tile_rows=tile_rows, start=start,
                  need_mask=need_mask, chunks=chunks):
                base = (g - start) * tile_rows
                for off, n in chunks:
                    x = x_refs[k][pl.ds(off, n), :].astype(jnp.float32)
                    if need_mask:
                        gr = (base + off
                              + jax.lax.broadcasted_iota(jnp.int32, (n, COLS), 0))
                        x = jnp.where(gr < rows, x, 1.0)   # log(1) = 0 identity
                    acc_ref[0:n, :] += jnp.log(x)

        @pl.when(i == pl.num_programs(1) - 1)
        def _():
            o_ref[...] = jnp.sum(acc_ref[...]).reshape(o_ref.shape)

    return kernel


def fused_log_sum(tensors):
    """sum over tensors of sum(log(t)), accumulated in float32, one pallas_call."""
    tensors = list(tensors)
    if not tensors:
        return jnp.zeros((), jnp.float32)

    slabs = [_to_slab(t, 1.0) for t in tensors]
    K = len(slabs)
    itemsize = max(jnp.dtype(s.dtype).itemsize for s in slabs)

    # Tile cap so that K inputs x 2 pipeline buffers stay within the byte budget.
    cap = min(MAX_TILE_ROWS,
              max(SUBLANE,
                  _round_down(IN_BYTES_BUDGET // (K * 2 * COLS * itemsize), SUBLANE)))

    metas, start = [], 0
    for s in slabs:
        rows = s.shape[0]
        tile = rows if rows <= cap else cap      # full-dim block is always legal
        nblocks = _cdiv(rows, tile)
        need_mask = nblocks * tile != rows       # ragged last block
        metas.append(dict(rows=rows, tile=tile, nblocks=nblocks, start=start,
                          need_mask=need_mask))
        start += nblocks
    total_blocks = start

    ncores = min(_num_tensorcores(), total_blocks)
    blocks_per_core = _cdiv(total_blocks, ncores)
    acc_rows = min(ACC_ROWS, _round_up(max(m["tile"] for m in metas), SUBLANE))

    meta_tuples = [(m["rows"], m["tile"], m["nblocks"], m["start"],
                    m["need_mask"], _chunks(m["tile"], acc_rows)) for m in metas]
    kernel = _make_multi_log_kernel(meta_tuples, blocks_per_core)

    def make_in_map(start_k, nblocks_k):
        def in_map(c, i):
            g = c * blocks_per_core + i
            return (jnp.clip(g - start_k, 0, nblocks_k - 1), 0)
        return in_map

    in_specs = [pl.BlockSpec((m["tile"], COLS), make_in_map(m["start"], m["nblocks"]))
                for m in metas]

    total_elems = sum(int(s.size) for s in slabs)
    bytes_in = sum(int(s.size) * jnp.dtype(s.dtype).itemsize for s in slabs)

    out = pl.pallas_call(
        kernel,
        out_shape=jax.ShapeDtypeStruct((ncores, 1, 1), jnp.float32),
        grid=(ncores, blocks_per_core),
        in_specs=in_specs,
        out_specs=pl.BlockSpec((1, 1, 1), lambda c, i: (c, 0, 0)),
        scratch_shapes=[pltpu.VMEM((acc_rows, COLS), jnp.float32)],
        compiler_params=pltpu.CompilerParams(
            dimension_semantics=("parallel", "arbitrary"),
            vmem_limit_bytes=VMEM_LIMIT_BYTES),
        cost_estimate=pl.CostEstimate(
            flops=total_elems,
            transcendentals=total_elems,
            bytes_accessed=bytes_in + ncores * 4),
    )(*slabs)
    return jnp.sum(out)


# ---------------------------------------------------------------------------
# sum((a - b)^2) over all elements (distortion term).
# ---------------------------------------------------------------------------
def _make_sq_diff_kernel(rows, tile_rows, acc_rows, blocks_per_core, need_mask):
    chunks = _chunks(tile_rows, acc_rows)

    def kernel(a_ref, b_ref, o_ref, acc_ref):
        c = pl.program_id(0)
        i = pl.program_id(1)

        @pl.when(i == 0)
        def _():
            acc_ref[...] = jnp.zeros_like(acc_ref)

        base = (c * blocks_per_core + i) * tile_rows
        for off, n in chunks:
            d = (a_ref[pl.ds(off, n), :].astype(jnp.float32)
                 - b_ref[pl.ds(off, n), :].astype(jnp.float32))
            if need_mask:
                gr = base + off + jax.lax.broadcasted_iota(jnp.int32, (n, COLS), 0)
                d = jnp.where(gr < rows, d, 0.0)
            acc_ref[0:n, :] += d * d

        @pl.when(i == pl.num_programs(1) - 1)
        def _():
            o_ref[...] = jnp.sum(acc_ref[...]).reshape(o_ref.shape)

    return kernel


def sq_diff_sum(a, b):
    sa = _to_slab(a, 0.0)
    sb = _to_slab(b, 0.0)
    rows = sa.shape[0]
    itemsize = max(jnp.dtype(sa.dtype).itemsize, jnp.dtype(sb.dtype).itemsize)

    cap = min(MAX_TILE_ROWS,
              max(SUBLANE,
                  _round_down(IN_BYTES_BUDGET // (2 * 2 * COLS * itemsize), SUBLANE)))
    tile_rows = rows if rows <= cap else cap
    nblocks = _cdiv(rows, tile_rows)

    ncores = min(_num_tensorcores(), nblocks)
    blocks_per_core = _cdiv(nblocks, ncores)
    acc_rows = min(ACC_ROWS, _round_up(tile_rows, SUBLANE))
    need_mask = ncores * blocks_per_core * tile_rows != rows

    def in_map(c, i):
        g = c * blocks_per_core + i
        if need_mask:
            g = jnp.minimum(g, nblocks - 1)
        return (g, 0)

    kernel = _make_sq_diff_kernel(rows, tile_rows, acc_rows, blocks_per_core, need_mask)

    out = pl.pallas_call(
        kernel,
        out_shape=jax.ShapeDtypeStruct((ncores, 1, 1), jnp.float32),
        grid=(ncores, blocks_per_core),
        in_specs=[pl.BlockSpec((tile_rows, COLS), in_map),
                  pl.BlockSpec((tile_rows, COLS), in_map)],
        out_specs=pl.BlockSpec((1, 1, 1), lambda c, i: (c, 0, 0)),
        scratch_shapes=[pltpu.VMEM((acc_rows, COLS), jnp.float32)],
        compiler_params=pltpu.CompilerParams(
            dimension_semantics=("parallel", "arbitrary"),
            vmem_limit_bytes=VMEM_LIMIT_BYTES),
        cost_estimate=pl.CostEstimate(
            flops=3 * int(a.size),
            transcendentals=0,
            bytes_accessed=(int(sa.size) * jnp.dtype(sa.dtype).itemsize
                            + int(sb.size) * jnp.dtype(sb.dtype).itemsize
                            + ncores * 4)),
    )(sa, sb)
    return jnp.sum(out)


# ---------------------------------------------------------------------------
# Rate-distortion loss wrapper (forward-pass semantics of the PyTorch module)
# ---------------------------------------------------------------------------
def rate_distortion_loss(output, target, lmbda=0.01):
    N, _, H, W = target.shape
    num_pixels = N * H * W

    likelihoods = list(output["likelihoods"].values())
    if likelihoods:
        # sum_k [ log(lk).sum() / (-ln2 * num_pixels) ]
        #   == [ sum_k log(lk).sum() ] / (-ln2 * num_pixels)   (same denominator)
        bpp_loss = fused_log_sum(likelihoods) / (-math.log(2) * num_pixels)
    else:
        bpp_loss = jnp.zeros((), jnp.float32)

    x_hat = output["x_hat"]
    mse_loss = sq_diff_sum(x_hat, target) / float(x_hat.size)   # nn.MSELoss 'mean'

    loss = lmbda * 255 ** 2 * mse_loss + bpp_loss
    return {"bpp_loss": bpp_loss, "mse_loss": mse_loss, "loss": loss}


# ---------------------------------------------------------------------------
# Reference (plain jnp) for correctness check
# ---------------------------------------------------------------------------
def _reference(output, target, lmbda=0.01):
    N, _, H, W = target.shape
    num_pixels = N * H * W
    bpp = sum(
        jnp.sum(jnp.log(lk)) / (-math.log(2) * num_pixels)
        for lk in output["likelihoods"].values()
    )
    mse = jnp.mean((output["x_hat"] - target) ** 2)
    return {"bpp_loss": bpp, "mse_loss": mse, "loss": lmbda * 255 ** 2 * mse + bpp}


if __name__ == "__main__":
    key = jax.random.PRNGKey(0)
    k1, k2, k3, k4 = jax.random.split(key, 4)

    # Small shapes consistent with a compression-model forward:
    #   x_hat / target : (N=2, C=4, H=16, W=16)
    #   likelihoods    : 'y' (2, 8, 16, 16), 'z' (2, 8, 8, 8), values in (0, 1]
    target = jax.random.normal(k1, (2, 4, 16, 16), dtype=jnp.float32)
    x_hat = target + 0.1 * jax.random.normal(k2, (2, 4, 16, 16), dtype=jnp.float32)
    like_y = jax.random.uniform(k3, (2, 8, 16, 16), dtype=jnp.float32,
                                minval=1e-3, maxval=1.0)
    like_z = jax.random.uniform(k4, (2, 8, 8, 8), dtype=jnp.float32,
                                minval=1e-3, maxval=1.0)

    model_output = {"x_hat": x_hat, "likelihoods": {"y": like_y, "z": like_z}}

    loss_fn = jax.jit(partial(rate_distortion_loss, lmbda=0.01))
    out = loss_fn(model_output, target)
    out = {k: jax.block_until_ready(v) for k, v in out.items()}

    ref = _reference(model_output, target, lmbda=0.01)
    for name in ("bpp_loss", "mse_loss", "loss"):
        assert jnp.allclose(out[name], ref[name], rtol=1e-5, atol=1e-5), (
            name, float(out[name]), float(ref[name]))

    print("KERNEL_OK")
</pallas_src>

<mosaic_0001>
module attributes {stable_mosaic.version = 11 : i64} {
  func.func @kernel(%arg0: i32, %arg1: i32, %arg2: memref<8x512xf32, #tpu.memory_space<vmem>>, %arg3: memref<2x512xf32, #tpu.memory_space<vmem>>, %arg4: memref<1x1x1xf32, #tpu.memory_space<vmem>>, %arg5: memref<8x512xf32, #tpu.memory_space<vmem>>) attributes {dimension_semantics = [#tpu.dimension_semantics<parallel>, #tpu.dimension_semantics<arbitrary>], iteration_bounds = array<i64: 1, 2>, scalar_prefetch = 0 : i64, scratch_operands = 1 : i64, tpu.core_type = #tpu.core_type<tc>, window_params = [{transform_indices = @transform_0, window_bounds = array<i64: 8, 512>}, {transform_indices = @transform_1, window_bounds = array<i64: 2, 512>}, {transform_indices = @transform_2, window_bounds = array<i64: 1, 1, 1>}]} {
    %c2_i32 = arith.constant 2 : i32
    %0 = arith.muli %arg0, %c2_i32 : i32
    %1 = arith.addi %0, %arg1 : i32
    %c0_i32 = arith.constant 0 : i32
    %2 = arith.cmpi eq, %arg1, %c0_i32 : i32
    %3 = arith.extui %2 : i1 to i32
    %c0_i32_0 = arith.constant 0 : i32
    %4 = arith.cmpi ne, %3, %c0_i32_0 : i32
    scf.if %4 {
      %cst = arith.constant 0.000000e+00 : f32
      %18 = vector.broadcast %cst : f32 to vector<8x512xf32>
      %c0 = arith.constant 0 : index
      %c0_8 = arith.constant 0 : index
      %19 = vector.load %arg5[%c0, %c0_8] : memref<8x512xf32, #tpu.memory_space<vmem>>, vector<8x512xf32>
      tpu.vector_store %arg5[%c0, %c0_8], %18 {strides = array<i32>} : memref<8x512xf32, #tpu.memory_space<vmem>>, vector<8x512xf32>,
    } else {
    }
    %c0_i32_1 = arith.constant 0 : i32
    %5 = arith.cmpi sge, %1, %c0_i32_1 : i32
    %c1_i32 = arith.constant 1 : i32
    %6 = arith.cmpi slt, %1, %c1_i32 : i32
    %7 = arith.andi %5, %6 : i1
    %8 = arith.extui %7 : i1 to i32
    %c0_i32_2 = arith.constant 0 : i32
    %9 = arith.cmpi ne, %8, %c0_i32_2 : i32
    scf.if %9 {
      %c0 = arith.constant 0 : index
      %c0_8 = arith.constant 0 : index
      %18 = vector.load %arg2[%c0, %c0_8] : memref<8x512xf32, #tpu.memory_space<vmem>>, vector<8x512xf32>
      %c0_9 = arith.constant 0 : index
      %c0_10 = arith.constant 0 : index
      %19 = vector.load %arg5[%c0_9, %c0_10] : memref<8x512xf32, #tpu.memory_space<vmem>>, vector<8x512xf32>
      %20 = math.log %18 : vector<8x512xf32>
      %21 = arith.addf %19, %20 : vector<8x512xf32>
      %c0_11 = arith.constant 0 : index
      %c0_12 = arith.constant 0 : index
      %22 = vector.load %arg5[%c0_11, %c0_12] : memref<8x512xf32, #tpu.memory_space<vmem>>, vector<8x512xf32>
      tpu.vector_store %arg5[%c0_11, %c0_12], %21 {strides = array<i32>} : memref<8x512xf32, #tpu.memory_space<vmem>>, vector<8x512xf32>,
    } else {
    }
    %c1_i32_3 = arith.constant 1 : i32
    %10 = arith.cmpi sge, %1, %c1_i32_3 : i32
    %c2_i32_4 = arith.constant 2 : i32
    %11 = arith.cmpi slt, %1, %c2_i32_4 : i32
    %12 = arith.andi %10, %11 : i1
    %13 = arith.extui %12 : i1 to i32
    %c0_i32_5 = arith.constant 0 : i32
    %14 = arith.cmpi ne, %13, %c0_i32_5 : i32
    scf.if %14 {
      %c0 = arith.constant 0 : index
      %c0_8 = arith.constant 0 : index
      %18 = vector.load %arg3[%c0, %c0_8] : memref<2x512xf32, #tpu.memory_space<vmem>>, vector<2x512xf32>
      %c0_9 = arith.constant 0 : index
      %c0_10 = arith.constant 0 : index
      %19 = vector.load %arg5[%c0_9, %c0_10] : memref<8x512xf32, #tpu.memory_space<vmem>>, vector<2x512xf32>
      %20 = math.log %18 : vector<2x512xf32>
      %21 = arith.addf %19, %20 : vector<2x512xf32>
      %c0_11 = arith.constant 0 : index
      %c0_12 = arith.constant 0 : index
      %22 = vector.load %arg5[%c0_11, %c0_12] : memref<8x512xf32, #tpu.memory_space<vmem>>, vector<2x512xf32>
      tpu.vector_store %arg5[%c0_11, %c0_12], %21 {strides = array<i32>} : memref<8x512xf32, #tpu.memory_space<vmem>>, vector<2x512xf32>,
    } else {
    }
    %c1_i32_6 = arith.constant 1 : i32
    %15 = arith.cmpi eq, %arg1, %c1_i32_6 : i32
    %16 = arith.extui %15 : i1 to i32
    %c0_i32_7 = arith.constant 0 : i32
    %17 = arith.cmpi ne, %16, %c0_i32_7 : i32
    scf.if %17 {
      %c0 = arith.constant 0 : index
      %c0_8 = arith.constant 0 : index
      %18 = vector.load %arg5[%c0, %c0_8] : memref<8x512xf32, #tpu.memory_space<vmem>>, vector<8x512xf32>
      %19 = vector.shape_cast %18 : vector<8x512xf32> to vector<1x8x512xf32>
      %cst = arith.constant dense<0.000000e+00> : vector<1xf32>
      %20 = vector.multi_reduction <add>, %19, %cst [1, 2] : vector<1x8x512xf32> to vector<1xf32>
      %21 = vector.shape_cast %20 : vector<1xf32> to vector<1x1x1xf32>
      %22 = vector.extract %21[0, 0, 0] : f32 from vector<1x1x1xf32>
      %23 = vector.broadcast %22 : f32 to vector<1x1x1xf32>
      %c0_9 = arith.constant 0 : index
      %c0_10 = arith.constant 0 : index
      %c0_11 = arith.constant 0 : index
      %24 = vector.load %arg4[%c0_9, %c0_10, %c0_11] : memref<1x1x1xf32, #tpu.memory_space<vmem>>, vector<1x1x1xf32>
      tpu.vector_store %arg4[%c0_9, %c0_10, %c0_11], %23 {strides = array<i32>} : memref<1x1x1xf32, #tpu.memory_space<vmem>>, vector<1x1x1xf32>,
    } else {
    }
    return
  }
  func.func @transform_0(%arg0: i32, %arg1: i32) -> (i32, i32) {
    %c2_i32 = arith.constant 2 : i32
    %0 = arith.muli %arg0, %c2_i32 : i32
    %1 = arith.addi %0, %arg1 : i32
    %c0_i32 = arith.constant 0 : i32
    %2 = arith.subi %1, %c0_i32 : i32
    %c0_i32_0 = arith.constant 0 : i32
    %c0_i32_1 = arith.constant 0 : i32
    %3 = arith.maxsi %c0_i32_0, %2 : i32
    %4 = arith.minsi %c0_i32_1, %3 : i32
    %c0_i32_2 = arith.constant 0 : i32
    %c0_i32_3 = arith.constant 0 : i32
    return %4, %c0_i32_2 : i32, i32
  }
  func.func @transform_1(%arg0: i32, %arg1: i32) -> (i32, i32) {
    %c2_i32 = arith.constant 2 : i32
    %0 = arith.muli %arg0, %c2_i32 : i32
    %1 = arith.addi %0, %arg1 : i32
    %c1_i32 = arith.constant 1 : i32
    %2 = arith.subi %1, %c1_i32 : i32
    %c0_i32 = arith.constant 0 : i32
    %c0_i32_0 = arith.constant 0 : i32
    %3 = arith.maxsi %c0_i32, %2 : i32
    %4 = arith.minsi %c0_i32_0, %3 : i32
    %c0_i32_1 = arith.constant 0 : i32
    %c0_i32_2 = arith.constant 0 : i32
    return %4, %c0_i32_1 : i32, i32
  }
  func.func @transform_2(%arg0: i32, %arg1: i32) -> (i32, i32, i32) {
    %c0_i32 = arith.constant 0 : i32
    %c0_i32_0 = arith.constant 0 : i32
    %c0_i32_1 = arith.constant 0 : i32
    return %arg0, %c0_i32, %c0_i32_0 : i32, i32, i32
  }
}

module attributes {stable_mosaic.version = 11 : i64} {
  func.func @kernel(%arg0: i32, %arg1: i32, %arg2: memref<4x512xf32, #tpu.memory_space<vmem>>, %arg3: memref<4x512xf32, #tpu.memory_space<vmem>>, %arg4: memref<1x1x1xf32, #tpu.memory_space<vmem>>, %arg5: memref<8x512xf32, #tpu.memory_space<vmem>>) attributes {dimension_semantics = [#tpu.dimension_semantics<parallel>, #tpu.dimension_semantics<arbitrary>], iteration_bounds = array<i64: 1, 1>, scalar_prefetch = 0 : i64, scratch_operands = 1 : i64, tpu.core_type = #tpu.core_type<tc>, window_params = [{transform_indices = @transform_0, window_bounds = array<i64: 4, 512>}, {transform_indices = @transform_1, window_bounds = array<i64: 4, 512>}, {transform_indices = @transform_2, window_bounds = array<i64: 1, 1, 1>}]} {
    %c0_i32 = arith.constant 0 : i32
    %0 = arith.cmpi eq, %arg1, %c0_i32 : i32
    %1 = arith.extui %0 : i1 to i32
    %c0_i32_0 = arith.constant 0 : i32
    %2 = arith.cmpi ne, %1, %c0_i32_0 : i32
    scf.if %2 {
      %cst = arith.constant 0.000000e+00 : f32
      %13 = vector.broadcast %cst : f32 to vector<8x512xf32>
      %c0_10 = arith.constant 0 : index
      %c0_11 = arith.constant 0 : index
      %14 = vector.load %arg5[%c0_10, %c0_11] : memref<8x512xf32, #tpu.memory_space<vmem>>, vector<8x512xf32>
      tpu.vector_store %arg5[%c0_10, %c0_11], %13 {strides = array<i32>} : memref<8x512xf32, #tpu.memory_space<vmem>>, vector<8x512xf32>,
    } else {
    }
    %c0 = arith.constant 0 : index
    %c0_1 = arith.constant 0 : index
    %3 = vector.load %arg2[%c0, %c0_1] : memref<4x512xf32, #tpu.memory_space<vmem>>, vector<4x512xf32>
    %c0_2 = arith.constant 0 : index
    %c0_3 = arith.constant 0 : index
    %4 = vector.load %arg3[%c0_2, %c0_3] : memref<4x512xf32, #tpu.memory_space<vmem>>, vector<4x512xf32>
    %5 = arith.subf %3, %4 : vector<4x512xf32>
    %c0_4 = arith.constant 0 : index
    %c0_5 = arith.constant 0 : index
    %6 = vector.load %arg5[%c0_4, %c0_5] : memref<8x512xf32, #tpu.memory_space<vmem>>, vector<4x512xf32>
    %7 = arith.mulf %5, %5 : vector<4x512xf32>
    %8 = arith.addf %6, %7 : vector<4x512xf32>
    %c0_6 = arith.constant 0 : index
    %c0_7 = arith.constant 0 : index
    %9 = vector.load %arg5[%c0_6, %c0_7] : memref<8x512xf32, #tpu.memory_space<vmem>>, vector<4x512xf32>
    tpu.vector_store %arg5[%c0_6, %c0_7], %8 {strides = array<i32>} : memref<8x512xf32, #tpu.memory_space<vmem>>, vector<4x512xf32>,
    %c0_i32_8 = arith.constant 0 : i32
    %10 = arith.cmpi eq, %arg1, %c0_i32_8 : i32
    %11 = arith.extui %10 : i1 to i32
    %c0_i32_9 = arith.constant 0 : i32
    %12 = arith.cmpi ne, %11, %c0_i32_9 : i32
    scf.if %12 {
      %c0_10 = arith.constant 0 : index
      %c0_11 = arith.constant 0 : index
      %13 = vector.load %arg5[%c0_10, %c0_11] : memref<8x512xf32, #tpu.memory_space<vmem>>, vector<8x512xf32>
      %14 = vector.shape_cast %13 : vector<8x512xf32> to vector<1x8x512xf32>
      %cst = arith.constant dense<0.000000e+00> : vector<1xf32>
      %15 = vector.multi_reduction <add>, %14, %cst [1, 2] : vector<1x8x512xf32> to vector<1xf32>
      %16 = vector.shape_cast %15 : vector<1xf32> to vector<1x1x1xf32>
      %17 = vector.extract %16[0, 0, 0] : f32 from vector<1x1x1xf32>
      %18 = vector.broadcast %17 : f32 to vector<1x1x1xf32>
      %c0_12 = arith.constant 0 : index
      %c0_13 = arith.constant 0 : index
      %c0_14 = arith.constant 0 : index
      %19 = vector.load %arg4[%c0_12, %c0_13, %c0_14] : memref<1x1x1xf32, #tpu.memory_space<vmem>>, vector<1x1x1xf32>
      tpu.vector_store %arg4[%c0_12, %c0_13, %c0_14], %18 {strides = array<i32>} : memref<1x1x1xf32, #tpu.memory_space<vmem>>, vector<1x1x1xf32>,
    } else {
    }
    return
  }
  func.func @transform_0(%arg0: i32, %arg1: i32) -> (i32, i32) {
    %c1_i32 = arith.constant 1 : i32
    %0 = arith.muli %arg0, %c1_i32 : i32
    %1 = arith.addi %0, %arg1 : i32
    %c0_i32 = arith.constant 0 : i32
    %c0_i32_0 = arith.constant 0 : i32
    return %1, %c0_i32 : i32, i32
  }
  func.func @transform_1(%arg0: i32, %arg1: i32) -> (i32, i32) {
    %c1_i32 = arith.constant 1 : i32
    %0 = arith.muli %arg0, %c1_i32 : i32
    %1 = arith.addi %0, %arg1 : i32
    %c0_i32 = arith.constant 0 : i32
    %c0_i32_0 = arith.constant 0 : i32
    return %1, %c0_i32 : i32, i32
  }
  func.func @transform_2(%arg0: i32, %arg1: i32) -> (i32, i32, i32) {
    %c0_i32 = arith.constant 0 : i32
    %c0_i32_0 = arith.constant 0 : i32
    %c0_i32_1 = arith.constant 0 : i32
    return %arg0, %c0_i32, %c0_i32_0 : i32, i32, i32
  }
}

</mosaic_0001>

<llo_original>
// kernel: rate_distortion_loss.2
$region0: #{rate_distortion_loss.2}
  #allocation0 [shape = 'u32[]', space=smem, size = 0x4, offset = 0x4, fixed_abs, tag = 'smem constant byte address 0x4 - core index']
  #allocation1 [shape = 'u32[144,128]{1,0:T(1,128)}', space=vmem, size = 0x12000, scoped, tag = 'internal scratch']
  #allocation2 [shape = 'f32[8,512]{1,0:T(8,128)}', space=vmem, size = 0x4000, scoped, tag = 'scratch operand']
  %s0 = inlined_call_operand.vmem [shape: f32[8,512], index: 0, kind: input, shape index: {}]
  %s1 = inlined_call_operand.vmem [shape: f32[2,512], index: 1, kind: input, shape index: {}]
  %s2 = inlined_call_operand.hbm [shape: f32[1,1,1], index: 2, kind: output, shape index: {}]
  %s3 = sld [smem:[#allocation0]]
  $region57: #{rate_distortion_loss.2} parent=0
    _
  %s5 = ssub.s32 1, %s3
  %s6 = scalar_select 0, %s5, %s3
  $region1: #{rate_distortion_loss.2} parent=0
    #allocation3 [shape = 'u8[512]{0}', space=vmem, size = 0x400, scoped, tag = 'output window, operand 0, single buffered']
    #allocation4 [shape = 's32[2]{0}', space=sflag, size = 0x8, scoped, tag = 'scoped memory for rate_distortion_loss.2']
    %7 = vsyncpa [#allocation4], 0
    loop: start=0, step=1, limit=4
    $region2: #{rate_distortion_loss.2} parent=1 // loop_pre_header
      _
    $region3: #{rate_distortion_loss.2} parent=1 // loop_header
      %s9 = sphi 0, %s13
      %p10 = scmp.ge.s32.totalorder %s9, 4
      %s16 = sphi 0, %s28
      %s17 = sphi 0, %s24
      %s18 = sphi 0, %s16
      %s19 = sphi 0, %s17
      %s20 = sphi 0, %s18
      %s21 = sphi 0, %s19
      %s43 = sphi 0, %s45
      %s46 = sphi 0, %s43
      %s47 = sphi 0, %s46
      %s63 = sphi 0, %s47
      %s83 = sphi 0, %s85
      %s86 = sphi 0, %s83
      %s87 = sphi 0, %s86
      %s103 = sphi 0, %s87
      %s109 = sphi 0, %s111
      %s112 = sphi 0, %s109
      %s113 = sphi 0, %s112
      %s129 = sphi 0, %s113
    $region4: #{rate_distortion_loss.2} parent=1 // loop_header_branch
      %12 = sbr.rel (%p10) target = $region8
    $region5: #{rate_distortion_loss.2} parent=1 // loop_body
      %s14 = ssub.s32 %s9, 1
      %s15 = ssub.s32 %s9, 2
      %s22 = sadd.s32 1, %s17
      %p23 = scmp.ge.s32.totalorder %s22, 2
      %s24 = scalar_select %p23, 0, %s22
      %s25 = sadd.s32 1, %s16
      %s26 = scalar_select %p23, %s25, %s16
      %p27 = scmp.ge.s32.totalorder %s26, 1
      %s28 = scalar_select %p27, 0, %s26
      %s29 = smul.u32 %s16, 2
      %s30 = sadd.s32 %s29, %s17
      %p31 = scmp.gt.s32.totalorder %s30, 0
      %s32 = scalar_select %p31, %s30, 0
      %p33 = scmp.lt.s32.totalorder %s32, 0
      %s34 = scalar_select %p33, %s32, 0
      %s35 = smul.u32 %s28, 2
      %s36 = sadd.s32 %s35, %s24
      %p37 = scmp.gt.s32.totalorder %s36, 0
      %s38 = scalar_select %p37, %s36, 0
      %p39 = scmp.lt.s32.totalorder %s38, 0
      %s40 = scalar_select %p39, %s38, 0
      %s41 = ssub.s32 %s34, %s40
      %p42 = scmp.eq.s32.totalorder %s41, 0
      %s44 = sadd.s32 %s43, 1
      %s45 = scalar_select %p42, %s43, %s44
      %p48 = pneg %p42
      %p49 = scmp.eq.s32.totalorder %s9, 1
      %p50 = por %p48, %p49
      %p51 = scmp.ne.s32.totalorder %s43, %s46
      %p52 = scmp.eq.s32.totalorder %s9, 0
      %p53 = por %p51, %p52
      %p54 = scmp.ne.s32.totalorder %s43, %s46
      %p55 = scmp.eq.s32.totalorder %s14, 1
      %p56 = por %p54, %p55
      %p57 = scmp.ne.s32.totalorder %s46, %s47
      %p58 = scmp.eq.s32.totalorder %s14, 0
      %p59 = por %p57, %p58
      %p60 = scmp.ne.s32.totalorder %s46, %s47
      %p61 = scmp.eq.s32.totalorder %s15, 1
      %p62 = por %p60, %p61
      %p64 = scmp.ne.s32.totalorder %s47, %s63
      %p65 = scmp.eq.s32.totalorder %s15, 0
      %p66 = por %p64, %p65
      %s67 = smul.u32 %s16, 2
      %s68 = sadd.s32 %s67, %s17
      %s69 = ssub.s32 %s68, 1
      %p70 = scmp.gt.s32.totalorder %s69, 0
      %s71 = scalar_select %p70, %s69, 0
      %p72 = scmp.lt.s32.totalorder %s71, 0
      %s73 = scalar_select %p72, %s71, 0
      %s74 = smul.u32 %s28, 2
      %s75 = sadd.s32 %s74, %s24
      %s76 = ssub.s32 %s75, 1
      %p77 = scmp.gt.s32.totalorder %s76, 0
      %s78 = scalar_select %p77, %s76, 0
      %p79 = scmp.lt.s32.totalorder %s78, 0
      %s80 = scalar_select %p79, %s78, 0
      %s81 = ssub.s32 %s73, %s80
      %p82 = scmp.eq.s32.totalorder %s81, 0
      %s84 = sadd.s32 %s83, 1
      %s85 = scalar_select %p82, %s83, %s84
      %p88 = pneg %p82
      %p89 = scmp.eq.s32.totalorder %s9, 1
      %p90 = por %p88, %p89
      %p91 = scmp.ne.s32.totalorder %s83, %s86
      %p92 = scmp.eq.s32.totalorder %s9, 0
      %p93 = por %p91, %p92
      %p94 = scmp.ne.s32.totalorder %s83, %s86
      %p95 = scmp.eq.s32.totalorder %s14, 1
      %p96 = por %p94, %p95
      %p97 = scmp.ne.s32.totalorder %s86, %s87
      %p98 = scmp.eq.s32.totalorder %s14, 0
      %p99 = por %p97, %p98
      %p100 = scmp.ne.s32.totalorder %s86, %s87
      %p101 = scmp.eq.s32.totalorder %s15, 1
      %p102 = por %p100, %p101
      %p104 = scmp.ne.s32.totalorder %s87, %s103
      %p105 = scmp.eq.s32.totalorder %s15, 0
      %p106 = por %p104, %p105
      %s107 = ssub.s32 %s16, %s28
      %p108 = scmp.eq.s32.totalorder %s107, 0
      %s110 = sadd.s32 %s109, 1
      %s111 = scalar_select %p108, %s109, %s110
      %p114 = pneg %p108
      %p115 = scmp.eq.s32.totalorder %s9, 1
      %p116 = por %p114, %p115
      %p117 = scmp.ne.s32.totalorder %s109, %s112
      %p118 = scmp.eq.s32.totalorder %s9, 0
      %p119 = por %p117, %p118
      %p120 = scmp.ne.s32.totalorder %s109, %s112
      %p121 = scmp.eq.s32.totalorder %s14, 1
      %p122 = por %p120, %p121
      %p123 = scmp.ne.s32.totalorder %s112, %s113
      %p124 = scmp.eq.s32.totalorder %s14, 0
      %p125 = por %p123, %p124
      %p126 = scmp.ne.s32.totalorder %s112, %s113
      %p127 = scmp.eq.s32.totalorder %s15, 1
      %p128 = por %p126, %p127
      %p130 = scmp.ne.s32.totalorder %s113, %s129
      %p131 = scmp.eq.s32.totalorder %s15, 0
      %p132 = por %p130, %p131
      %p133 = scmp.le.s32.totalorder 1, %s9
      %p134 = scmp.lt.s32.totalorder %s9, 3
      %p135 = pnand %p133, %p134
      %p136 = pneg %p135
      // Predicated region
      $region9: #{rate_distortion_loss.2} parent=5 // pred_check
        _
      $region10: #{rate_distortion_loss.2} parent=5 // pred_check_branch
        %138 = sbr.rel (%p135) target = $region12
      $region11: #{rate_distortion_loss.2} parent=5 // pred_region
        %s139 = ssub.s32 %s9, 1
      $region12: #{rate_distortion_loss.2} parent=5 // pred_fallthru
        _
      %p140 = scmp.lt.s32.totalorder %s9, 2
      // Predicated region
      $region13: #{rate_distortion_loss.2} parent=5 // pred_check
        %p141 = pneg %p140
      $region14: #{rate_distortion_loss.2} parent=5 // pred_check_branch
        %143 = sbr.rel (%p141) target = $region16
      $region15: #{rate_distortion_loss.2} parent=5 // pred_region
        // Predicated region
        $region17: #{rate_distortion_loss.2} parent=15 // pred_check
          %p144 = pneg %p53
        $region18: #{rate_distortion_loss.2} parent=15 // pred_check_branch
          %146 = sbr.rel (%p144) target = $region20
        $region19: #{rate_distortion_loss.2} parent=15 // pred_region
          %s147 = smul.u32 %s16, 2
          %s148 = sadd.s32 %s147, %s17
          %p149 = scmp.gt.s32.totalorder %s148, 0
          %s150 = scalar_select %p149, %s148, 0
          %p151 = scmp.lt.s32.totalorder %s150, 0
          %s152 = scalar_select %p151, %s150, 0
          %p153 = scmp.lt.s32.totalorder %s152, 0
          %s154 = scalar_select %p153, %s152, 0
          %s155 = smul.addr %s154, 4
          %s156 = smul.addr %s155, 8
          %s157 = scalar_lea.vmem %s0, %s156
          %s158 = smul.u32 %s16, 2
          %s159 = sadd.s32 %s158, %s17
          %p160 = scmp.gt.s32.totalorder %s159, 0
          %s161 = scalar_select %p160, %s159, 0
          %p162 = scmp.lt.s32.totalorder %s161, 0
          %s163 = scalar_select %p162, %s161, 0
        $region20: #{rate_distortion_loss.2} parent=15 // pred_fallthru
          _
        // Predicated region
        $region21: #{rate_distortion_loss.2} parent=15 // pred_check
          %p164 = pneg %p93
        $region22: #{rate_distortion_loss.2} parent=15 // pred_check_branch
          %166 = sbr.rel (%p164) target = $region24
        $region23: #{rate_distortion_loss.2} parent=15 // pred_region
          %s167 = smul.u32 %s16, 2
          %s168 = sadd.s32 %s167, %s17
          %s169 = ssub.s32 %s168, 1
          %p170 = scmp.gt.s32.totalorder %s169, 0
          %s171 = scalar_select %p170, %s169, 0
          %p172 = scmp.lt.s32.totalorder %s171, 0
          %s173 = scalar_select %p172, %s171, 0
          %p174 = scmp.lt.s32.totalorder %s173, 0
          %s175 = scalar_select %p174, %s173, 0
          %s176 = smul.addr %s175, 4
          %s177 = smul.addr %s176, 2
          %s178 = scalar_lea.vmem %s1, %s177
          %s179 = smul.u32 %s16, 2
          %s180 = sadd.s32 %s179, %s17
          %s181 = ssub.s32 %s180, 1
          %p182 = scmp.gt.s32.totalorder %s181, 0
          %s183 = scalar_select %p182, %s181, 0
          %p184 = scmp.lt.s32.totalorder %s183, 0
          %s185 = scalar_select %p184, %s183, 0
        $region24: #{rate_distortion_loss.2} parent=15 // pred_fallthru
          _
      $region16: #{rate_distortion_loss.2} parent=5 // pred_fallthru
        _
      %p186 = scmp.le.s32.totalorder 1, %s9
      %p187 = scmp.lt.s32.totalorder %s9, 3
      %p188 = pnand %p186, %p187
      %p189 = pneg %p188
      // Predicated region
      $region25: #{rate_distortion_loss.2} parent=5 // pred_check
        _
      $region26: #{rate_distortion_loss.2} parent=5 // pred_check_branch
        %191 = sbr.rel (%p188) target = $region28
      $region27: #{rate_distortion_loss.2} parent=5 // pred_region
        %s192 = ssub.s32 %s9, 1
        %s193 = smul.u32 %s18, 2
        %s194 = sadd.s32 %s193, %s19
        %p195 = scmp.gt.s32.totalorder %s194, 0
        %s196 = scalar_select %p195, %s194, 0
        %p197 = scmp.lt.s32.totalorder %s196, 0
        %s198 = scalar_select %p197, %s196, 0
        %p199 = scmp.lt.s32.totalorder %s198, 0
        %s200 = scalar_select %p199, %s198, 0
        %s201 = smul.addr %s200, 4
        %s202 = smul.addr %s201, 8
        %s203 = scalar_lea.vmem %s0, %s202
        %p204 = pneg %p59
        %p205 = pneg %p56
        %s206 = smul.u32 %s18, 2
        %s207 = sadd.s32 %s206, %s19
        %s208 = ssub.s32 %s207, 1
        %p209 = scmp.gt.s32.totalorder %s208, 0
        %s210 = scalar_select %p209, %s208, 0
        %p211 = scmp.lt.s32.totalorder %s210, 0
        %s212 = scalar_select %p211, %s210, 0
        %p213 = scmp.lt.s32.totalorder %s212, 0
        %s214 = scalar_select %p213, %s212, 0
        %s215 = smul.addr %s214, 4
        %s216 = smul.addr %s215, 2
        %s217 = scalar_lea.vmem %s1, %s216
        %p218 = pneg %p99
        %p219 = pneg %p96
        %p220 = pneg %p125
        %p221 = pneg %p122
        %s222 = smul.u32 %s18, 2
        %s223 = sadd.s32 %s222, %s19
        %p224 = scmp.gt.s32.totalorder %s223, 0
        %s225 = scalar_select %p224, %s223, 0
        %p226 = scmp.lt.s32.totalorder %s225, 0
        %s227 = scalar_select %p226, %s225, 0
        %p228 = scmp.lt.s32.totalorder %s227, 0
        %s229 = scalar_select %p228, %s227, 0
        %s230 = smul.addr %s229, 4
        %s231 = smul.addr %s230, 8
        %s232 = scalar_lea.vmem %s0, %s231
        %s233 = smul.u32 %s18, 2
        %s234 = sadd.s32 %s233, %s19
        %p235 = scmp.gt.s32.totalorder %s234, 0
        %s236 = scalar_select %p235, %s234, 0
        %p237 = scmp.lt.s32.totalorder %s236, 0
        %s238 = scalar_select %p237, %s236, 0
        %s239 = smul.u32 %s18, 2
        %s240 = sadd.s32 %s239, %s19
        %s241 = ssub.s32 %s240, 1
        %p242 = scmp.gt.s32.totalorder %s241, 0
        %s243 = scalar_select %p242, %s241, 0
        %p244 = scmp.lt.s32.totalorder %s243, 0
        %s245 = scalar_select %p244, %s243, 0
        %p246 = scmp.lt.s32.totalorder %s245, 0
        %s247 = scalar_select %p246, %s245, 0
        %s248 = smul.addr %s247, 4
        %s249 = smul.addr %s248, 2
        %s250 = scalar_lea.vmem %s1, %s249
        %s251 = smul.u32 %s18, 2
        %s252 = sadd.s32 %s251, %s19
        %s253 = ssub.s32 %s252, 1
        %p254 = scmp.gt.s32.totalorder %s253, 0
        %s255 = scalar_select %p254, %s253, 0
        %p256 = scmp.lt.s32.totalorder %s255, 0
        %s257 = scalar_select %p256, %s255, 0
        %s258 = smul.u32 %s18, 2
        %s259 = sadd.s32 %s258, %s19
        %p260 = scmp.eq.s32.totalorder %s19, 0
        // Predicated region
        $region29: #{rate_distortion_loss.2} parent=27 // pred_check
          %p261 = pneg %p260
        $region30: #{rate_distortion_loss.2} parent=27 // pred_check_branch
          %263 = sbr.rel (%p261) target = $region32
        $region31: #{rate_distortion_loss.2} parent=27 // pred_region
          %264 = vst [vmem:[#allocation2] sm:$0xff] 0.0
          %265 = vst [vmem:[#allocation2 + $0x8] sm:$0xff] 0.0
          %266 = vst [vmem:[#allocation2 + $0x10] sm:$0xff] 0.0
          %267 = vst [vmem:[#allocation2 + $0x18] sm:$0xff] 0.0
        $region32: #{rate_distortion_loss.2} parent=27 // pred_fallthru
          _
        %p268 = scmp.ge.s32.totalorder %s259, 0
        %p269 = scmp.lt.s32.totalorder %s259, 1
        %p270 = pnand %p268, %p269
        %p271 = pneg %p270
        // Predicated region
        $region33: #{rate_distortion_loss.2} parent=27 // pred_check
          _
        $region34: #{rate_distortion_loss.2} parent=27 // pred_check_branch
          %273 = sbr.rel (%p270) target = $region36
        $region35: #{rate_distortion_loss.2} parent=27 // pred_region
          %v274 = vld [vmem:[%s232] sm:$0xff]
          %v275 = vld [vmem:[%s232 + $0x8] sm:$0xff]
          %v276 = vld [vmem:[%s232 + $0x10] sm:$0xff]
          %v277 = vld [vmem:[%s232 + $0x18] sm:$0xff]
          %v278 = vld [vmem:[#allocation2] sm:$0xff]
          %v279 = vld [vmem:[#allocation2 + $0x8] sm:$0xff]
          %v280 = vld [vmem:[#allocation2 + $0x10] sm:$0xff]
          %v281 = vld [vmem:[#allocation2 + $0x18] sm:$0xff]
          %v282 = vlog2.pop %v274
          %v283 = vmul.f32 %v282, 0.6931472
          %v284 = vlog2.pop %v275
          %v285 = vmul.f32 %v284, 0.6931472
          %v286 = vlog2.pop %v276
          %v287 = vmul.f32 %v286, 0.6931472
          %v288 = vlog2.pop %v277
          %v289 = vmul.f32 %v288, 0.6931472
          %v290 = vadd.f32 %v278, %v283
          %v291 = vadd.f32 %v279, %v285
          %v292 = vadd.f32 %v280, %v287
          %v293 = vadd.f32 %v281, %v289
          %294 = vst [vmem:[#allocation2] sm:$0xff] %v290
          %295 = vst [vmem:[#allocation2 + $0x8] sm:$0xff] %v291
          %296 = vst [vmem:[#allocation2 + $0x10] sm:$0xff] %v292
          %297 = vst [vmem:[#allocation2 + $0x18] sm:$0xff] %v293
        $region36: #{rate_distortion_loss.2} parent=27 // pred_fallthru
          _
        %p298 = scmp.ge.s32.totalorder %s259, 1
        %p299 = scmp.lt.s32.totalorder %s259, 2
        %p300 = pnand %p298, %p299
        %p301 = pneg %p300
        // Predicated region
        $region37: #{rate_distortion_loss.2} parent=27 // pred_check
          _
        $region38: #{rate_distortion_loss.2} parent=27 // pred_check_branch
          %303 = sbr.rel (%p300) target = $region40
        $region39: #{rate_distortion_loss.2} parent=27 // pred_region
          %v304 = vld [vmem:[%s250] sm:$0xff]
          %v305 = vld [vmem:[#allocation2] sm:$0x3]
          %v306 = vld [vmem:[#allocation2 + $0x8] sm:$0x3]
          %v307 = vld [vmem:[#allocation2 + $0x10] sm:$0x3]
          %v308 = vld [vmem:[#allocation2 + $0x18] sm:$0x3]
          %v309 = vlog2.pop %v304
          %v310 = vmul.f32 %v309, 0.6931472
          %v312 = vcombine.high %v310, %v310
          %v314 = vunpack.c.l.s4 1983009808
          %v315 = vunpack.c.0.s8 %v314
          %v316 = vlaneseq
          %v317 = vshrl.u32 %v316, 7
          %v318 = vsub.s32 %v315, %v317
          %v319 = vrot.slane %v310, %v318
          %v321 = vunpack.c.l.s4 1983009808
          %v322 = vunpack.c.0.s8 %v321
          %v323 = vlaneseq
          %v324 = vshrl.u32 %v323, 7
          %v325 = vsub.s32 %v322, %v324
          %v326 = vrot.slane %v312, %v325
          %v327 = vcombine.high %v319, %v319
          %v328 = vcombine.high %v326, %v326
          %v333 = vadd.f32 %v305, %v319
          %v334 = vadd.f32 %v306, %v327
          %v335 = vadd.f32 %v307, %v326
          %v336 = vadd.f32 %v308, %v328
          %337 = vst [vmem:[#allocation2] sm:$0x3] %v333
          %338 = vst [vmem:[#allocation2 + $0x8] sm:$0x3] %v334
          %339 = vst [vmem:[#allocation2 + $0x10] sm:$0x3] %v335
          %340 = vst [vmem:[#allocation2 + $0x18] sm:$0x3] %v336
        $region40: #{rate_distortion_loss.2} parent=27 // pred_fallthru
          _
        %p341 = scmp.eq.s32.totalorder %s19, 1
        // Predicated region
        $region41: #{rate_distortion_loss.2} parent=27 // pred_check
          %p342 = pneg %p341
        $region42: #{rate_distortion_loss.2} parent=27 // pred_check_branch
          %344 = sbr.rel (%p342) target = $region44
        $region43: #{rate_distortion_loss.2} parent=27 // pred_region
          %v345 = vld [vmem:[#allocation2] sm:$0xff]
          %v346 = vld [vmem:[#allocation2 + $0x8] sm:$0xff]
          %v347 = vld [vmem:[#allocation2 + $0x10] sm:$0xff]
          %v348 = vld [vmem:[#allocation2 + $0x18] sm:$0xff]
          %v349 = vadd.f32 %v345, %v346
          %v350 = vadd.f32 %v349, %v347
          %v351 = vadd.f32 %v350, %v348
          %352 = vadd.xlane.f32.xlu0 %v351
          %v353 = vpop.xlane.xlu0 %352
          %v354 = vrot.slane %v353, 4
          %v355 = vadd.f32 %v353, %v354
          %v356 = vrot.slane %v355, 2
          %v357 = vadd.f32 %v355, %v356
          %v358 = vrot.slane %v357, 1
          %v359 = vadd.f32 %v357, %v358
          %s360 = vtos %v359
          %v361 = vstv %s360
          %vm362 = vcmask 0
          %363 = vst.msk [vmem:[#allocation3] sm:$0x1] %vm362, %v361
        $region44: #{rate_distortion_loss.2} parent=27 // pred_fallthru
          _
        // Predicated region
        $region45: #{rate_distortion_loss.2} parent=27 // pred_check
          %p364 = pneg %p122
        $region46: #{rate_distortion_loss.2} parent=27 // pred_check_branch
          %366 = sbr.rel (%p364) target = $region48
        $region47: #{rate_distortion_loss.2} parent=27 // pred_region
          %s368 = ssub.s32 16, 16
          %369 = vsyncadd [#allocation4], %s368
          %s370 = smul.addr %s18, 16
          %s371 = scalar_lea.hbm %s2, %s370
          %s373 = sshll.u32 [#allocation3], 4
          %s374 = int_to_ptr.vmem [resolvable:$true] %s373
          %376 = dma.vmem_to_hbm [thread:$0]  %s374, 16, %s371, [#allocation4]
        $region48: #{rate_distortion_loss.2} parent=27 // pred_fallthru
          _
        // Predicated region
        $region49: #{rate_distortion_loss.2} parent=27 // pred_check
          %p377 = pneg %p122
        $region50: #{rate_distortion_loss.2} parent=27 // pred_check_branch
          %379 = sbr.rel (%p377) target = $region52
        $region51: #{rate_distortion_loss.2} parent=27 // pred_region
          %380 = dma.done [#allocation4], 16
        $region52: #{rate_distortion_loss.2} parent=27 // pred_fallthru
          _
      $region28: #{rate_distortion_loss.2} parent=5 // pred_fallthru
        _
      %p381 = scmp.le.s32.totalorder 2, %s9
      // Predicated region
      $region53: #{rate_distortion_loss.2} parent=5 // pred_check
        %p382 = pneg %p381
      $region54: #{rate_distortion_loss.2} parent=5 // pred_check_branch
        %384 = sbr.rel (%p382) target = $region56
      $region55: #{rate_distortion_loss.2} parent=5 // pred_region
        %s385 = ssub.s32 %s9, 2
      $region56: #{rate_distortion_loss.2} parent=5 // pred_fallthru
        _
    $region6: #{rate_distortion_loss.2} parent=1 // loop_footer
      %s13 = sadd.s32 1, %s9
    $region7: #{rate_distortion_loss.2} parent=1 // loop_footer_branch
      %8 = sbr.rel target = $region3
    $region8: #{rate_distortion_loss.2} parent=1 // loop_exit
      _
    %386 = vsyncpa [#allocation4], 1
    %s387 = scalar_lea.sflag [#allocation4], 1
    %388 = vsyncpa %s387, 1

// kernel: rate_distortion_loss.3
$region0: #{rate_distortion_loss.3}
  #allocation0 [shape = 'u32[]', space=smem, size = 0x4, offset = 0x4, fixed_abs, tag = 'smem constant byte address 0x4 - core index']
  #allocation1 [shape = 'u32[144,128]{1,0:T(1,128)}', space=vmem, size = 0x12000, scoped, tag = 'internal scratch']
  #allocation2 [shape = 'f32[8,512]{1,0:T(8,128)}', space=vmem, size = 0x4000, scoped, tag = 'scratch operand']
  %s0 = inlined_call_operand.vmem [shape: f32[4,512], index: 0, kind: input, shape index: {}]
  %s1 = inlined_call_operand.vmem [shape: f32[4,512], index: 1, kind: input, shape index: {}]
  %s2 = inlined_call_operand.hbm [shape: f32[1,1,1], index: 2, kind: output, shape index: {}]
  %s3 = sld [smem:[#allocation0]]
  $region26: #{rate_distortion_loss.3} parent=0
    _
  %s5 = ssub.s32 1, %s3
  %s6 = scalar_select 0, %s5, %s3
  $region1: #{rate_distortion_loss.3} parent=0
    #allocation3 [shape = 'u8[512]{0}', space=vmem, size = 0x400, scoped, tag = 'output window, operand 0, single buffered']
    #allocation4 [shape = 's32[1]{0}', space=sflag, size = 0x4, scoped, tag = 'scoped memory for rate_distortion_loss.3']
    %7 = vsyncpa [#allocation4], 0
    // Predicated region
    $region2: #{rate_distortion_loss.3} parent=1 // pred_check
      _
    $region3: #{rate_distortion_loss.3} parent=1 // pred_check_branch
      %9 = sbr.rel (0) target = $region5
    $region4: #{rate_distortion_loss.3} parent=1 // pred_region
      %s10 = sadd.s32 0, 0
      %p11 = scmp.lt.s32.totalorder %s10, 0
      %s12 = scalar_select %p11, %s10, 0
      %s13 = smul.addr %s12, 4
      %s14 = smul.addr %s13, 4
      %s15 = scalar_lea.vmem %s0, %s14
      %s16 = sadd.s32 0, 0
    $region5: #{rate_distortion_loss.3} parent=1 // pred_fallthru
      _
    // Predicated region
    $region6: #{rate_distortion_loss.3} parent=1 // pred_check
      _
    $region7: #{rate_distortion_loss.3} parent=1 // pred_check_branch
      %18 = sbr.rel (0) target = $region9
    $region8: #{rate_distortion_loss.3} parent=1 // pred_region
      %s19 = sadd.s32 0, 0
      %p20 = scmp.lt.s32.totalorder %s19, 0
      %s21 = scalar_select %p20, %s19, 0
      %s22 = smul.addr %s21, 4
      %s23 = smul.addr %s22, 4
      %s24 = scalar_lea.vmem %s1, %s23
      %s25 = sadd.s32 0, 0
    $region9: #{rate_distortion_loss.3} parent=1 // pred_fallthru
      _
    %s26 = sadd.s32 0, 0
    %p27 = scmp.lt.s32.totalorder %s26, 0
    %s28 = scalar_select %p27, %s26, 0
    %s29 = smul.addr %s28, 4
    %s30 = smul.addr %s29, 4
    %s31 = scalar_lea.vmem %s0, %s30
    %s32 = sadd.s32 0, 0
    %p33 = scmp.lt.s32.totalorder %s32, 0
    %s34 = scalar_select %p33, %s32, 0
    %s35 = smul.addr %s34, 4
    %s36 = smul.addr %s35, 4
    %s37 = scalar_lea.vmem %s1, %s36
    %s38 = sadd.s32 0, 0
    %p39 = scmp.lt.s32.totalorder %s38, 0
    %s40 = scalar_select %p39, %s38, 0
    %s41 = smul.addr %s40, 4
    %s42 = smul.addr %s41, 4
    %s43 = scalar_lea.vmem %s0, %s42
    %s44 = sadd.s32 0, 0
    %s45 = sadd.s32 0, 0
    %p46 = scmp.lt.s32.totalorder %s45, 0
    %s47 = scalar_select %p46, %s45, 0
    %s48 = smul.addr %s47, 4
    %s49 = smul.addr %s48, 4
    %s50 = scalar_lea.vmem %s1, %s49
    %s51 = sadd.s32 0, 0
    %p52 = scmp.eq.s32.totalorder 0, 0
    // Predicated region
    $region10: #{rate_distortion_loss.3} parent=1 // pred_check
      %p53 = pneg %p52
    $region11: #{rate_distortion_loss.3} parent=1 // pred_check_branch
      %55 = sbr.rel (%p53) target = $region13
    $region12: #{rate_distortion_loss.3} parent=1 // pred_region
      %56 = vst [vmem:[#allocation2] sm:$0xff] 0.0
      %57 = vst [vmem:[#allocation2 + $0x8] sm:$0xff] 0.0
      %58 = vst [vmem:[#allocation2 + $0x10] sm:$0xff] 0.0
      %59 = vst [vmem:[#allocation2 + $0x18] sm:$0xff] 0.0
    $region13: #{rate_distortion_loss.3} parent=1 // pred_fallthru
      _
    %v60 = vld [vmem:[%s43] sm:$0xff]
    %v61 = vld [vmem:[%s43 + $0x8] sm:$0xff]
    %v62 = vld [vmem:[%s50] sm:$0xff]
    %v63 = vld [vmem:[%s50 + $0x8] sm:$0xff]
    %v64 = vsub.f32 %v60, %v62
    %v65 = vsub.f32 %v61, %v63
    %v66 = vld [vmem:[#allocation2] sm:$0xf]
    %v67 = vld [vmem:[#allocation2 + $0x8] sm:$0xf]
    %v68 = vld [vmem:[#allocation2 + $0x10] sm:$0xf]
    %v69 = vld [vmem:[#allocation2 + $0x18] sm:$0xf]
    %v70 = vmul.f32 %v64, %v64
    %v71 = vmul.f32 %v65, %v65
    %v74 = vcombine.high %v70, %v70
    %v75 = vcombine.high %v71, %v71
    %v78 = vadd.f32 %v66, %v70
    %v79 = vadd.f32 %v67, %v74
    %v80 = vadd.f32 %v68, %v71
    %v81 = vadd.f32 %v69, %v75
    %82 = vst [vmem:[#allocation2] sm:$0xf] %v78
    %83 = vst [vmem:[#allocation2 + $0x8] sm:$0xf] %v79
    %84 = vst [vmem:[#allocation2 + $0x10] sm:$0xf] %v80
    %85 = vst [vmem:[#allocation2 + $0x18] sm:$0xf] %v81
    // Predicated region
    $region14: #{rate_distortion_loss.3} parent=1 // pred_check
      %p86 = pneg %p52
    $region15: #{rate_distortion_loss.3} parent=1 // pred_check_branch
      %88 = sbr.rel (%p86) target = $region17
    $region16: #{rate_distortion_loss.3} parent=1 // pred_region
      %v89 = vld [vmem:[#allocation2] sm:$0xff]
      %v90 = vld [vmem:[#allocation2 + $0x8] sm:$0xff]
      %v91 = vld [vmem:[#allocation2 + $0x10] sm:$0xff]
      %v92 = vld [vmem:[#allocation2 + $0x18] sm:$0xff]
      %v93 = vadd.f32 %v89, %v90
      %v94 = vadd.f32 %v93, %v91
      %v95 = vadd.f32 %v94, %v92
      %96 = vadd.xlane.f32.xlu0 %v95
      %v97 = vpop.xlane.xlu0 %96
      %v98 = vrot.slane %v97, 4
      %v99 = vadd.f32 %v97, %v98
      %v100 = vrot.slane %v99, 2
      %v101 = vadd.f32 %v99, %v100
      %v102 = vrot.slane %v101, 1
      %v103 = vadd.f32 %v101, %v102
      %s104 = vtos %v103
      %v105 = vstv %s104
      %vm106 = vcmask 0
      %107 = vst.msk [vmem:[#allocation3] sm:$0x1] %vm106, %v105
    $region17: #{rate_distortion_loss.3} parent=1 // pred_fallthru
      _
    // Predicated region
    $region18: #{rate_distortion_loss.3} parent=1 // pred_check
      _
    $region19: #{rate_distortion_loss.3} parent=1 // pred_check_branch
      %109 = sbr.rel (0) target = $region21
    $region20: #{rate_distortion_loss.3} parent=1 // pred_region
      %s111 = ssub.s32 16, 16
      %112 = vsyncadd [#allocation4], %s111
      %s114 = sshll.u32 [#allocation3], 4
      %s115 = int_to_ptr.vmem [resolvable:$true] %s114
      %117 = dma.vmem_to_hbm [thread:$0]  %s115, 16, %s2, [#allocation4]
    $region21: #{rate_distortion_loss.3} parent=1 // pred_fallthru
      _
    // Predicated region
    $region22: #{rate_distortion_loss.3} parent=1 // pred_check
      _
    $region23: #{rate_distortion_loss.3} parent=1 // pred_check_branch
      %119 = sbr.rel (0) target = $region25
    $region24: #{rate_distortion_loss.3} parent=1 // pred_region
      %120 = dma.done [#allocation4], 16
    $region25: #{rate_distortion_loss.3} parent=1 // pred_fallthru
      _
    %121 = vsyncpa [#allocation4], 1

</llo_original>
